<compile_context>
chip_gen: v7x
topology: tpu7x:2x2x1
jax: 0.10.0
libtpu: 0.0.40
codegen_flags: <defaults>
</compile_context>

<pallas_src>
import functools

import jax
import jax.numpy as jnp
from jax.experimental import pallas as pl
from jax.experimental.pallas import tpu as pltpu

LANE = 128     # vreg lane width (last dim)
SUBLANE = 8    # vreg sublane count (second-to-last dim)


def _round_up(x, m):
    return (x + m - 1) // m * m


def _pad2(a, rows, cols, dtype):
    """Zero-pad a 2-D array into a (rows, cols) array of `dtype`."""
    out = jnp.zeros((rows, cols), dtype)
    return out.at[: a.shape[0], : a.shape[1]].set(a.astype(dtype))


def _choose_tile_n(n, requested, vmem_ok):
    """Pick an MXU/packing-aligned row-slab size.

    >=16 rows (bf16 sublane packing), multiples of 256 for big batches (MXU M
    granularity), >=2 slabs when possible (v7x megacore), shrink to fit VMEM.
    """
    if n <= 256:
        return max(16, _round_up(n, 16))
    n_p = _round_up(n, 256)
    max_t = min(requested, n_p // 2 if n_p >= 512 else n_p)
    max_t = max(256, (max_t // 256) * 256)
    candidates = [t for t in range(max_t, 0, -256) if n_p % t == 0] or [256]
    for t in candidates:
        if vmem_ok(t):
            return t
    return candidates[-1]


def prepare_params(w1, b1, w2, b2, compute_dtype=jnp.bfloat16):
    """Pad/cast parameters ONCE at model init (hoisted off the per-call path).

    Zero padding is exact: padded x cols hit zero w1 rows, padded hidden cols
    have zero w1 cols / b1 entries / w2 rows, padded d_out cols have zero w2
    cols / b2 entries -> padded outputs are exactly 0 and sliced off.
    """
    d_in, hidden = w1.shape
    d_out = w2.shape[1]
    d_in_p = _round_up(d_in, LANE)
    hid_p = _round_up(hidden, LANE)
    d_out_p = _round_up(d_out, LANE)
    w1_p = _pad2(w1, d_in_p, hid_p, compute_dtype)
    b1_p = _pad2(b1.reshape(1, -1), 1, hid_p, jnp.float32)
    w2_p = _pad2(w2, hid_p, d_out_p, compute_dtype)
    b2_p = _pad2(b2.reshape(1, -1), 1, d_out_p, jnp.float32)
    return w1_p, b1_p, w2_p, b2_p


@functools.partial(jax.jit, static_argnames=("d_out", "tile_n", "single_buffer_weights"))
def two_layer_net(x, w1_p, b1_p, w2_p, b2_p, *, d_out, tile_n=512,
                  single_buffer_weights=True):
    """Fused Linear -> ReLU -> Linear.  x: (N, d_in); params from prepare_params()."""
    n, d_in = x.shape
    d_in_p, hid_p = w1_p.shape
    d_out_p = w2_p.shape[1]
    compute_dtype = w1_p.dtype
    out_dtype = x.dtype
    cbytes = jnp.dtype(compute_dtype).itemsize
    obytes = jnp.dtype(out_dtype).itemsize

    # Hidden-dim chunk per inner step: largest of {512,384,256,128} dividing hid_p.
    h_blk = 128
    for cand in (512, 384, 256, 128):
        if cand <= hid_p and hid_p % cand == 0:
            h_blk = cand
            break
    n_blocks = hid_p // h_blk

    # Generation-aware VMEM budget (~105 MiB on v5e/v6e, ~52 MiB on v7x).
    try:
        vmem_cap = int(pltpu.get_tpu_info().vmem_capacity_bytes)
    except Exception:
        vmem_cap = 64 * 1024 * 1024          # conservative (v7x-sized) fallback
    budget = int(vmem_cap * 0.82)

    wbuf = 1 if single_buffer_weights else 2

    def vmem_needed(t):
        return (
            2 * t * d_in_p * cbytes                    # x slab (double-buffered)
            + 2 * t * d_out_p * obytes                 # out slab (double-buffered)
            + wbuf * d_in_p * hid_p * cbytes           # w1 (VMEM-resident)
            + wbuf * hid_p * d_out_p * cbytes          # w2 (VMEM-resident)
            + wbuf * SUBLANE * (hid_p + d_out_p) * 4   # biases (sublane-padded f32)
            + t * d_out_p * 4                          # f32 accumulator scratch
            + t * h_blk * 4                            # f32 hidden-block intermediate
            + t * d_in_p * cbytes                      # loaded x slab value
        )

    tile_n = _choose_tile_n(n, tile_n, lambda t: vmem_needed(t) <= budget)
    n_p = _round_up(n, tile_n)
    if vmem_needed(tile_n) > budget:
        # TODO(synk): add a grid-level K-tiling path (reduction axis over hidden /
        # d_in marked "arbitrary", f32 acc scratch with pl.when init/finalize) for
        # weights too large to stay VMEM-resident (mainly v7x's 64 MiB at hidden~4k).
        raise ValueError(
            f"weights too large for VMEM residency: need {vmem_needed(tile_n)} B, "
            f"budget {budget} B")

    # x is only padded/cast when misaligned (weights were pre-padded at init).
    if n == n_p and d_in == d_in_p and x.dtype == compute_dtype:
        x_p = x
    else:
        x_p = jnp.zeros((n_p, d_in_p), compute_dtype).at[:n, :d_in].set(
            x.astype(compute_dtype))

    def mlp_kernel(x_ref, w1_ref, b1_ref, w2_ref, b2_ref, o_ref, acc_ref):
        x_blk = x_ref[...]                       # (tile_n, d_in_p), reused across chunks
        acc_ref[...] = jnp.zeros_like(acc_ref)

        def hidden_block(off):
            # One hidden chunk: matmul -> bias -> ReLU -> downcast -> matmul-acc.
            # No full (tile_n, hid_p) f32 intermediate is ever materialized.
            h = jnp.dot(x_blk, w1_ref[:, pl.ds(off, h_blk)],
                        preferred_element_type=jnp.float32)
            h = jnp.maximum(h + b1_ref[:, pl.ds(off, h_blk)], 0.0)
            acc_ref[...] += jnp.dot(h.astype(w2_ref.dtype),
                                    w2_ref[pl.ds(off, h_blk), :],
                                    preferred_element_type=jnp.float32)

        if n_blocks <= 8:
            # Short trip count: fully unrolled, static offsets (LLO visibility).
            for j in range(n_blocks):
                hidden_block(j * h_blk)
        else:
            def body(j, carry):
                hidden_block(pl.multiple_of(j * h_blk, h_blk))
                return carry
            jax.lax.fori_loop(0, n_blocks, body, 0)

        o_ref[...] = (acc_ref[...] + b2_ref[...]).astype(o_ref.dtype)

    def resident(shape):
        # Constant index_map -> the block never changes across grid steps, so a
        # single buffer suffices (halves the weight VMEM footprint).
        if single_buffer_weights:
            return pl.BlockSpec(shape, lambda i: (0, 0), pipeline_mode=pl.Buffered(1))
        return pl.BlockSpec(shape, lambda i: (0, 0))

    flops = 2 * n_p * (d_in_p * hid_p + hid_p * d_out_p)
    bytes_accessed = (n_p * d_in_p * cbytes
                      + (d_in_p * hid_p + hid_p * d_out_p) * cbytes
                      + (hid_p + d_out_p) * 4
                      + n_p * d_out_p * obytes)

    out_padded = pl.pallas_call(
        mlp_kernel,
        out_shape=jax.ShapeDtypeStruct((n_p, d_out_p), out_dtype),
        grid=(n_p // tile_n,),
        in_specs=[
            pl.BlockSpec((tile_n, d_in_p), lambda i: (i, 0)),   # x: streamed per slab
            resident((d_in_p, hid_p)),                          # w1: VMEM-resident
            resident((1, hid_p)),                               # b1
            resident((hid_p, d_out_p)),                         # w2: VMEM-resident
            resident((1, d_out_p)),                             # b2
        ],
        out_specs=pl.BlockSpec((tile_n, d_out_p), lambda i: (i, 0)),
        scratch_shapes=[pltpu.VMEM((tile_n, d_out_p), jnp.float32)],
        compiler_params=pltpu.CompilerParams(
            dimension_semantics=("parallel",),   # row slabs split across v7x's 2 TCs
            vmem_limit_bytes=budget,
        ),
        cost_estimate=pl.CostEstimate(
            flops=flops, transcendentals=0, bytes_accessed=bytes_accessed),
    )(x_p, w1_p, b1_p, w2_p, b2_p)

    return out_padded[:n, :d_out]


def reference(x, w1, b1, w2, b2, compute_dtype=jnp.bfloat16):
    # Mirrors the kernel's bf16-operand / f32-accumulate / single-downcast numerics.
    f32 = jnp.float32
    hp = jax.lax.Precision.HIGHEST
    xc = x.astype(compute_dtype).astype(f32)
    w1c = w1.astype(compute_dtype).astype(f32)
    w2c = w2.astype(compute_dtype).astype(f32)
    h = jnp.maximum(jnp.dot(xc, w1c, precision=hp) + b1, 0.0)
    hc = h.astype(compute_dtype).astype(f32)
    return jnp.dot(hc, w2c, precision=hp) + b2


if __name__ == "__main__":
    # Small shapes consistent with TwoLayerNet(d_in, hidden_size, d_out).
    N, D_IN, HIDDEN, D_OUT = 8, 32, 32, 16

    key = jax.random.PRNGKey(0)
    kx, kw1, kb1, kw2, kb2 = jax.random.split(key, 5)

    x = jax.random.normal(kx, (N, D_IN), dtype=jnp.float32)
    # torch.nn.Linear weights, pre-transposed to (in, out).
    w1 = jax.random.normal(kw1, (D_IN, HIDDEN), dtype=jnp.float32) * (1.0 / jnp.sqrt(D_IN))
    b1 = jax.random.normal(kb1, (1, HIDDEN), dtype=jnp.float32) * 0.1
    w2 = jax.random.normal(kw2, (HIDDEN, D_OUT), dtype=jnp.float32) * (1.0 / jnp.sqrt(HIDDEN))
    b2 = jax.random.normal(kb2, (1, D_OUT), dtype=jnp.float32) * 0.1

    # Padding/casting of weights happens once here, not per forward call.
    params = prepare_params(w1, b1, w2, b2)

    try:
        y = two_layer_net(x, *params, d_out=D_OUT, single_buffer_weights=True)
        jax.block_until_ready(y)
    except Exception:
        # Fallback if this Pallas build rejects pipeline_mode=pl.Buffered(1):
        # identical kernel with default double-buffered resident weights.
        y = two_layer_net(x, *params, d_out=D_OUT, single_buffer_weights=False)
        jax.block_until_ready(y)

    y_ref = reference(x, w1, b1, w2, b2)
    assert y.shape == (N, D_OUT)
    assert y.dtype == x.dtype
    assert jnp.allclose(y, y_ref, atol=1e-3, rtol=1e-3), float(jnp.max(jnp.abs(y - y_ref)))

    print("KERNEL_OK")
</pallas_src>

<mosaic_0001>
module attributes {stable_mosaic.version = 11 : i64} {
  func.func @mlp_kernel(%arg0: i32, %arg1: memref<16x128xbf16, #tpu.memory_space<vmem>>, %arg2: memref<128x128xbf16, #tpu.memory_space<vmem>>, %arg3: memref<1x128xf32, #tpu.memory_space<vmem>>, %arg4: memref<128x128xbf16, #tpu.memory_space<vmem>>, %arg5: memref<1x128xf32, #tpu.memory_space<vmem>>, %arg6: memref<16x128xf32, #tpu.memory_space<vmem>>, %arg7: memref<16x128xf32, #tpu.memory_space<vmem>>) attributes {dimension_semantics = [#tpu.dimension_semantics<parallel>], iteration_bounds = array<i64: 1>, scalar_prefetch = 0 : i64, scratch_operands = 1 : i64, tpu.core_type = #tpu.core_type<tc>, window_params = [{transform_indices = @transform_0, window_bounds = array<i64: 16, 128>}, {pipeline_mode = #tpu.pipeline_mode<synchronous>, transform_indices = @transform_1, window_bounds = array<i64: 128, 128>}, {pipeline_mode = #tpu.pipeline_mode<synchronous>, transform_indices = @transform_2, window_bounds = array<i64: 1, 128>}, {pipeline_mode = #tpu.pipeline_mode<synchronous>, transform_indices = @transform_3, window_bounds = array<i64: 128, 128>}, {pipeline_mode = #tpu.pipeline_mode<synchronous>, transform_indices = @transform_4, window_bounds = array<i64: 1, 128>}, {transform_indices = @transform_5, window_bounds = array<i64: 16, 128>}]} {
    %c0 = arith.constant 0 : index
    %c0_0 = arith.constant 0 : index
    %0 = vector.load %arg1[%c0, %c0_0] : memref<16x128xbf16, #tpu.memory_space<vmem>>, vector<16x128xbf16>
    %cst = arith.constant 0.000000e+00 : f32
    %1 = vector.broadcast %cst : f32 to vector<16x128xf32>
    %c0_1 = arith.constant 0 : index
    %c0_2 = arith.constant 0 : index
    %2 = vector.load %arg7[%c0_1, %c0_2] : memref<16x128xf32, #tpu.memory_space<vmem>>, vector<16x128xf32>
    tpu.vector_store %arg7[%c0_1, %c0_2], %1 {strides = array<i32>} : memref<16x128xf32, #tpu.memory_space<vmem>>, vector<16x128xf32>,
    %c0_3 = arith.constant 0 : index
    %c0_4 = arith.constant 0 : index
    %3 = vector.load %arg2[%c0_3, %c0_4] : memref<128x128xbf16, #tpu.memory_space<vmem>>, vector<128x128xbf16>
    %cst_5 = arith.constant dense<0.000000e+00> : vector<16x128xf32>
    %4 = tpu.matmul %0, %3, %cst_5 {dimension_numbers = #tpu.dot_dimension_numbers<[1], [0], [0], [1], [0, 0, 1, 1], [], []>} : vector<16x128xbf16>, vector<128x128xbf16>, vector<16x128xf32> -> vector<16x128xf32>
    %c0_6 = arith.constant 0 : index
    %c0_7 = arith.constant 0 : index
    %5 = vector.load %arg3[%c0_6, %c0_7] : memref<1x128xf32, #tpu.memory_space<vmem>>, vector<1x128xf32>
    %6 = vector.broadcast %5 : vector<1x128xf32> to vector<16x128xf32>
    %7 = arith.addf %4, %6 : vector<16x128xf32>
    %cst_8 = arith.constant 0.000000e+00 : f32
    %8 = vector.broadcast %cst_8 : f32 to vector<16x128xf32>
    %9 = arith.maximumf %7, %8 : vector<16x128xf32>
    %c0_9 = arith.constant 0 : index
    %c0_10 = arith.constant 0 : index
    %10 = vector.load %arg7[%c0_9, %c0_10] : memref<16x128xf32, #tpu.memory_space<vmem>>, vector<16x128xf32>
    %11 = arith.truncf %9 : vector<16x128xf32> to vector<16x128xbf16>
    %c0_11 = arith.constant 0 : index
    %c0_12 = arith.constant 0 : index
    %12 = vector.load %arg4[%c0_11, %c0_12] : memref<128x128xbf16, #tpu.memory_space<vmem>>, vector<128x128xbf16>
    %cst_13 = arith.constant dense<0.000000e+00> : vector<16x128xf32>
    %13 = tpu.matmul %11, %12, %cst_13 {dimension_numbers = #tpu.dot_dimension_numbers<[1], [0], [0], [1], [0, 0, 1, 1], [], []>} : vector<16x128xbf16>, vector<128x128xbf16>, vector<16x128xf32> -> vector<16x128xf32>
    %14 = arith.addf %10, %13 : vector<16x128xf32>
    %c0_14 = arith.constant 0 : index
    %c0_15 = arith.constant 0 : index
    %15 = vector.load %arg7[%c0_14, %c0_15] : memref<16x128xf32, #tpu.memory_space<vmem>>, vector<16x128xf32>
    tpu.vector_store %arg7[%c0_14, %c0_15], %14 {strides = array<i32>} : memref<16x128xf32, #tpu.memory_space<vmem>>, vector<16x128xf32>,
    %c0_16 = arith.constant 0 : index
    %c0_17 = arith.constant 0 : index
    %16 = vector.load %arg7[%c0_16, %c0_17] : memref<16x128xf32, #tpu.memory_space<vmem>>, vector<16x128xf32>
    %c0_18 = arith.constant 0 : index
    %c0_19 = arith.constant 0 : index
    %17 = vector.load %arg5[%c0_18, %c0_19] : memref<1x128xf32, #tpu.memory_space<vmem>>, vector<1x128xf32>
    %18 = vector.broadcast %17 : vector<1x128xf32> to vector<16x128xf32>
    %19 = arith.addf %16, %18 : vector<16x128xf32>
    %c0_20 = arith.constant 0 : index
    %c0_21 = arith.constant 0 : index
    %20 = vector.load %arg6[%c0_20, %c0_21] : memref<16x128xf32, #tpu.memory_space<vmem>>, vector<16x128xf32>
    tpu.vector_store %arg6[%c0_20, %c0_21], %19 {strides = array<i32>} : memref<16x128xf32, #tpu.memory_space<vmem>>, vector<16x128xf32>,
    return
  }
  func.func @transform_0(%arg0: i32) -> (i32, i32) {
    %c0_i32 = arith.constant 0 : i32
    %c0_i32_0 = arith.constant 0 : i32
    return %arg0, %c0_i32 : i32, i32
  }
  func.func @transform_1(%arg0: i32) -> (i32, i32) {
    %c0_i32 = arith.constant 0 : i32
    %c0_i32_0 = arith.constant 0 : i32
    %c0_i32_1 = arith.constant 0 : i32
    return %c0_i32, %c0_i32_0 : i32, i32
  }
  func.func @transform_2(%arg0: i32) -> (i32, i32) {
    %c0_i32 = arith.constant 0 : i32
    %c0_i32_0 = arith.constant 0 : i32
    %c0_i32_1 = arith.constant 0 : i32
    return %c0_i32, %c0_i32_0 : i32, i32
  }
  func.func @transform_3(%arg0: i32) -> (i32, i32) {
    %c0_i32 = arith.constant 0 : i32
    %c0_i32_0 = arith.constant 0 : i32
    %c0_i32_1 = arith.constant 0 : i32
    return %c0_i32, %c0_i32_0 : i32, i32
  }
  func.func @transform_4(%arg0: i32) -> (i32, i32) {
    %c0_i32 = arith.constant 0 : i32
    %c0_i32_0 = arith.constant 0 : i32
    %c0_i32_1 = arith.constant 0 : i32
    return %c0_i32, %c0_i32_0 : i32, i32
  }
  func.func @transform_5(%arg0: i32) -> (i32, i32) {
    %c0_i32 = arith.constant 0 : i32
    %c0_i32_0 = arith.constant 0 : i32
    return %arg0, %c0_i32 : i32, i32
  }
}

module attributes {stable_mosaic.version = 11 : i64} {
  func.func @mlp_kernel(%arg0: i32, %arg1: memref<16x128xbf16, #tpu.memory_space<vmem>>, %arg2: memref<128x128xbf16, #tpu.memory_space<vmem>>, %arg3: memref<1x128xf32, #tpu.memory_space<vmem>>, %arg4: memref<128x128xbf16, #tpu.memory_space<vmem>>, %arg5: memref<1x128xf32, #tpu.memory_space<vmem>>, %arg6: memref<16x128xf32, #tpu.memory_space<vmem>>, %arg7: memref<16x128xf32, #tpu.memory_space<vmem>>) attributes {dimension_semantics = [#tpu.dimension_semantics<parallel>], iteration_bounds = array<i64: 1>, scalar_prefetch = 0 : i64, scratch_operands = 1 : i64, tpu.core_type = #tpu.core_type<tc>, window_params = [{transform_indices = @transform_0, window_bounds = array<i64: 16, 128>}, {pipeline_mode = #tpu.pipeline_mode<synchronous>, transform_indices = @transform_1, window_bounds = array<i64: 128, 128>}, {pipeline_mode = #tpu.pipeline_mode<synchronous>, transform_indices = @transform_2, window_bounds = array<i64: 1, 128>}, {pipeline_mode = #tpu.pipeline_mode<synchronous>, transform_indices = @transform_3, window_bounds = array<i64: 128, 128>}, {pipeline_mode = #tpu.pipeline_mode<synchronous>, transform_indices = @transform_4, window_bounds = array<i64: 1, 128>}, {transform_indices = @transform_5, window_bounds = array<i64: 16, 128>}]} {
    %c0 = arith.constant 0 : index
    %c0_0 = arith.constant 0 : index
    %0 = vector.load %arg1[%c0, %c0_0] : memref<16x128xbf16, #tpu.memory_space<vmem>>, vector<16x128xbf16>
    %cst = arith.constant 0.000000e+00 : f32
    %1 = vector.broadcast %cst : f32 to vector<16x128xf32>
    %c0_1 = arith.constant 0 : index
    %c0_2 = arith.constant 0 : index
    %2 = vector.load %arg7[%c0_1, %c0_2] : memref<16x128xf32, #tpu.memory_space<vmem>>, vector<16x128xf32>
    tpu.vector_store %arg7[%c0_1, %c0_2], %1 {strides = array<i32>} : memref<16x128xf32, #tpu.memory_space<vmem>>, vector<16x128xf32>,
    %c0_3 = arith.constant 0 : index
    %c0_4 = arith.constant 0 : index
    %3 = vector.load %arg2[%c0_3, %c0_4] : memref<128x128xbf16, #tpu.memory_space<vmem>>, vector<128x128xbf16>
    %cst_5 = arith.constant dense<0.000000e+00> : vector<16x128xf32>
    %4 = tpu.matmul %0, %3, %cst_5 {dimension_numbers = #tpu.dot_dimension_numbers<[1], [0], [0], [1], [0, 0, 1, 1], [], []>} : vector<16x128xbf16>, vector<128x128xbf16>, vector<16x128xf32> -> vector<16x128xf32>
    %c0_6 = arith.constant 0 : index
    %c0_7 = arith.constant 0 : index
    %5 = vector.load %arg3[%c0_6, %c0_7] : memref<1x128xf32, #tpu.memory_space<vmem>>, vector<1x128xf32>
    %6 = vector.broadcast %5 : vector<1x128xf32> to vector<16x128xf32>
    %7 = arith.addf %4, %6 : vector<16x128xf32>
    %cst_8 = arith.constant 0.000000e+00 : f32
    %8 = vector.broadcast %cst_8 : f32 to vector<16x128xf32>
    %9 = arith.maximumf %7, %8 : vector<16x128xf32>
    %c0_9 = arith.constant 0 : index
    %c0_10 = arith.constant 0 : index
    %10 = vector.load %arg7[%c0_9, %c0_10] : memref<16x128xf32, #tpu.memory_space<vmem>>, vector<16x128xf32>
    %11 = arith.truncf %9 : vector<16x128xf32> to vector<16x128xbf16>
    %c0_11 = arith.constant 0 : index
    %c0_12 = arith.constant 0 : index
    %12 = vector.load %arg4[%c0_11, %c0_12] : memref<128x128xbf16, #tpu.memory_space<vmem>>, vector<128x128xbf16>
    %cst_13 = arith.constant dense<0.000000e+00> : vector<16x128xf32>
    %13 = tpu.matmul %11, %12, %cst_13 {dimension_numbers = #tpu.dot_dimension_numbers<[1], [0], [0], [1], [0, 0, 1, 1], [], []>} : vector<16x128xbf16>, vector<128x128xbf16>, vector<16x128xf32> -> vector<16x128xf32>
    %14 = arith.addf %10, %13 : vector<16x128xf32>
    %c0_14 = arith.constant 0 : index
    %c0_15 = arith.constant 0 : index
    %15 = vector.load %arg7[%c0_14, %c0_15] : memref<16x128xf32, #tpu.memory_space<vmem>>, vector<16x128xf32>
    tpu.vector_store %arg7[%c0_14, %c0_15], %14 {strides = array<i32>} : memref<16x128xf32, #tpu.memory_space<vmem>>, vector<16x128xf32>,
    %c0_16 = arith.constant 0 : index
    %c0_17 = arith.constant 0 : index
    %16 = vector.load %arg7[%c0_16, %c0_17] : memref<16x128xf32, #tpu.memory_space<vmem>>, vector<16x128xf32>
    %c0_18 = arith.constant 0 : index
    %c0_19 = arith.constant 0 : index
    %17 = vector.load %arg5[%c0_18, %c0_19] : memref<1x128xf32, #tpu.memory_space<vmem>>, vector<1x128xf32>
    %18 = vector.broadcast %17 : vector<1x128xf32> to vector<16x128xf32>
    %19 = arith.addf %16, %18 : vector<16x128xf32>
    %c0_20 = arith.constant 0 : index
    %c0_21 = arith.constant 0 : index
    %20 = vector.load %arg6[%c0_20, %c0_21] : memref<16x128xf32, #tpu.memory_space<vmem>>, vector<16x128xf32>
    tpu.vector_store %arg6[%c0_20, %c0_21], %19 {strides = array<i32>} : memref<16x128xf32, #tpu.memory_space<vmem>>, vector<16x128xf32>,
    return
  }
  func.func @transform_0(%arg0: i32) -> (i32, i32) {
    %c0_i32 = arith.constant 0 : i32
    %c0_i32_0 = arith.constant 0 : i32
    return %arg0, %c0_i32 : i32, i32
  }
  func.func @transform_1(%arg0: i32) -> (i32, i32) {
    %c0_i32 = arith.constant 0 : i32
    %c0_i32_0 = arith.constant 0 : i32
    %c0_i32_1 = arith.constant 0 : i32
    return %c0_i32, %c0_i32_0 : i32, i32
  }
  func.func @transform_2(%arg0: i32) -> (i32, i32) {
    %c0_i32 = arith.constant 0 : i32
    %c0_i32_0 = arith.constant 0 : i32
    %c0_i32_1 = arith.constant 0 : i32
    return %c0_i32, %c0_i32_0 : i32, i32
  }
  func.func @transform_3(%arg0: i32) -> (i32, i32) {
    %c0_i32 = arith.constant 0 : i32
    %c0_i32_0 = arith.constant 0 : i32
    %c0_i32_1 = arith.constant 0 : i32
    return %c0_i32, %c0_i32_0 : i32, i32
  }
  func.func @transform_4(%arg0: i32) -> (i32, i32) {
    %c0_i32 = arith.constant 0 : i32
    %c0_i32_0 = arith.constant 0 : i32
    %c0_i32_1 = arith.constant 0 : i32
    return %c0_i32, %c0_i32_0 : i32, i32
  }
  func.func @transform_5(%arg0: i32) -> (i32, i32) {
    %c0_i32 = arith.constant 0 : i32
    %c0_i32_0 = arith.constant 0 : i32
    return %arg0, %c0_i32 : i32, i32
  }
}

</mosaic_0001>

<llo_original>
// kernel: two_layer_net.1
$region0: #{two_layer_net.1}
  #allocation0 [shape = 'u32[]', space=smem, size = 0x4, offset = 0x4, fixed_abs, tag = 'smem constant byte address 0x4 - core index']
  #allocation1 [shape = 'u32[144,128]{1,0:T(1,128)}', space=vmem, size = 0x12000, scoped, tag = 'internal scratch']
  #allocation2 [shape = 'f32[16,128]{1,0:T(8,128)}', space=vmem, size = 0x2000, scoped, tag = 'scratch operand']
  %s0 = inlined_call_operand.vmem [shape: bf16[16,128], index: 0, kind: input, shape index: {}]
  %s1 = inlined_call_operand.hbm [shape: bf16[128,128], index: 1, kind: input, shape index: {}]
  %s2 = inlined_call_operand.vmem [shape: f32[1,128], index: 2, kind: input, shape index: {}]
  %s3 = inlined_call_operand.hbm [shape: bf16[128,128], index: 3, kind: input, shape index: {}]
  %s4 = inlined_call_operand.vmem [shape: f32[1,128], index: 4, kind: input, shape index: {}]
  %s5 = inlined_call_operand.vmem [shape: f32[16,128], index: 5, kind: output, shape index: {}]
  %s6 = sld [smem:[#allocation0]]
  $region38: #{two_layer_net.1} parent=0
    _
  %s8 = ssub.s32 1, %s6
  %s9 = scalar_select 0, %s8, %s6
  $region1: #{two_layer_net.1} parent=0
    #allocation3 [shape = 'u8[32768]{0}', space=vmem, size = 0x8000, scoped, tag = 'input window, operand 1, single buffered']
    #allocation4 [shape = 's32[1]{0}', space=sflag, size = 0x4, scoped, tag = 'scoped memory for two_layer_net.1']
    #allocation5 [shape = 'u8[32768]{0}', space=vmem, size = 0x8000, scoped, tag = 'input window, operand 3, single buffered']
    #allocation6 [shape = 's32[1]{0}', space=sflag, size = 0x4, scoped, tag = 'scoped memory for two_layer_net.1']
    %10 = vsyncpa [#allocation4], 0
    %11 = vsyncpa [#allocation6], 0
    // Predicated region
    $region2: #{two_layer_net.1} parent=1 // pred_check
      _
    $region3: #{two_layer_net.1} parent=1 // pred_check_branch
      %13 = sbr.rel (0) target = $region5
    $region4: #{two_layer_net.1} parent=1 // pred_region
      _
    $region5: #{two_layer_net.1} parent=1 // pred_fallthru
      _
    // Predicated region
    $region6: #{two_layer_net.1} parent=1 // pred_check
      _
    $region7: #{two_layer_net.1} parent=1 // pred_check_branch
      %15 = sbr.rel (0) target = $region9
    $region8: #{two_layer_net.1} parent=1 // pred_region
      %s17 = ssub.s32 1024, 1024
      %18 = vsyncadd [#allocation4], %s17
      %s19 = sshll.u32 [#allocation3], 4
      %s20 = int_to_ptr.vmem [resolvable:$true] %s19
      %25 = dma.hbm_to_vmem [thread:$0]  %s1, 1024, %s20, [#allocation4], 64, 64, 4
    $region9: #{two_layer_net.1} parent=1 // pred_fallthru
      _
    // Predicated region
    $region10: #{two_layer_net.1} parent=1 // pred_check
      _
    $region11: #{two_layer_net.1} parent=1 // pred_check_branch
      %27 = sbr.rel (0) target = $region13
    $region12: #{two_layer_net.1} parent=1 // pred_region
      _
    $region13: #{two_layer_net.1} parent=1 // pred_fallthru
      _
    // Predicated region
    $region14: #{two_layer_net.1} parent=1 // pred_check
      _
    $region15: #{two_layer_net.1} parent=1 // pred_check_branch
      %29 = sbr.rel (0) target = $region17
    $region16: #{two_layer_net.1} parent=1 // pred_region
      %s31 = ssub.s32 1024, 1024
      %32 = vsyncadd [#allocation6], %s31
      %s33 = sshll.u32 [#allocation5], 4
      %s34 = int_to_ptr.vmem [resolvable:$true] %s33
      %39 = dma.hbm_to_vmem [thread:$0]  %s3, 1024, %s34, [#allocation6], 64, 64, 4
    $region17: #{two_layer_net.1} parent=1 // pred_fallthru
      _
    // Predicated region
    $region18: #{two_layer_net.1} parent=1 // pred_check
      _
    $region19: #{two_layer_net.1} parent=1 // pred_check_branch
      %41 = sbr.rel (0) target = $region21
    $region20: #{two_layer_net.1} parent=1 // pred_region
      _
    $region21: #{two_layer_net.1} parent=1 // pred_fallthru
      _
    // Predicated region
    $region22: #{two_layer_net.1} parent=1 // pred_check
      _
    $region23: #{two_layer_net.1} parent=1 // pred_check_branch
      %43 = sbr.rel (0) target = $region25
    $region24: #{two_layer_net.1} parent=1 // pred_region
      %44 = dma.done [#allocation4], 1024
    $region25: #{two_layer_net.1} parent=1 // pred_fallthru
      _
    // Predicated region
    $region26: #{two_layer_net.1} parent=1 // pred_check
      _
    $region27: #{two_layer_net.1} parent=1 // pred_check_branch
      %46 = sbr.rel (0) target = $region29
    $region28: #{two_layer_net.1} parent=1 // pred_region
      %47 = dma.done [#allocation6], 1024
    $region29: #{two_layer_net.1} parent=1 // pred_fallthru
      _
    %v49 = vld [vmem:[%s0] sm:$0xf]
    %v50 = vld [vmem:[%s0 + $0x4] sm:$0xf]
    %51 = vst [vmem:[#allocation2] sm:$0xff] 0.0
    %52 = vst [vmem:[#allocation2 + $0x8] sm:$0xff] 0.0
    %v53 = vld [vmem:[#allocation3] sm:$0xf]
    %v54 = vld [vmem:[#allocation3 + $0x4] sm:$0xf]
    %v55 = vld [vmem:[#allocation3 + $0x8] sm:$0xf]
    %v56 = vld [vmem:[#allocation3 + $0xc] sm:$0xf]
    %v57 = vld [vmem:[#allocation3 + $0x10] sm:$0xf]
    %v58 = vld [vmem:[#allocation3 + $0x14] sm:$0xf]
    %v59 = vld [vmem:[#allocation3 + $0x18] sm:$0xf]
    %v60 = vld [vmem:[#allocation3 + $0x1c] sm:$0xf]
    %v61 = vld [vmem:[#allocation3 + $0x20] sm:$0xf]
    %v62 = vld [vmem:[#allocation3 + $0x24] sm:$0xf]
    %v63 = vld [vmem:[#allocation3 + $0x28] sm:$0xf]
    %v64 = vld [vmem:[#allocation3 + $0x2c] sm:$0xf]
    %v65 = vld [vmem:[#allocation3 + $0x30] sm:$0xf]
    %v66 = vld [vmem:[#allocation3 + $0x34] sm:$0xf]
    %v67 = vld [vmem:[#allocation3 + $0x38] sm:$0xf]
    %v68 = vld [vmem:[#allocation3 + $0x3c] sm:$0xf]
    %v69 = vld [vmem:[%s2] sm:$0x1]
    %v71 = vlaneseq
    %v72 = vshrl.u32 %v71, 7
    %v73 = vsub.s32 0, %v72
    %v74 = vrot.slane %v69, %v73
    %v78 = vunpack.c.l.b16 %v49
    %v79 = vunpack.c.l.b16 %v50
    %v80 = vpack.c.b16 %v79, %v78
    %v98 = vunpack.c.l.b16 %v53
    %v99 = vunpack.c.l.b16 %v54
    %v100 = vunpack.c.l.b16 %v55
    %v101 = vunpack.c.l.b16 %v56
    %v102 = vunpack.c.l.b16 %v57
    %v103 = vunpack.c.l.b16 %v58
    %v104 = vunpack.c.l.b16 %v59
    %v105 = vunpack.c.l.b16 %v60
    %v106 = vunpack.c.l.b16 %v61
    %v107 = vunpack.c.l.b16 %v62
    %v108 = vunpack.c.l.b16 %v63
    %v109 = vunpack.c.l.b16 %v64
    %v110 = vunpack.c.l.b16 %v65
    %v111 = vunpack.c.l.b16 %v66
    %v112 = vunpack.c.l.b16 %v67
    %v113 = vunpack.c.l.b16 %v68
    %v114 = vpack.c.b16 %v99, %v98
    %v115 = vpack.c.b16 %v101, %v100
    %v116 = vpack.c.b16 %v103, %v102
    %v117 = vpack.c.b16 %v105, %v104
    %v118 = vpack.c.b16 %v107, %v106
    %v119 = vpack.c.b16 %v109, %v108
    %v120 = vpack.c.b16 %v111, %v110
    %v121 = vpack.c.b16 %v113, %v112
    %130 = vmatprep.subr.bf16.mxu0 0
    %131 = vmatpush1.bf16.msra.mxu0 %v114
    %132 = vmatprep.subr.bf16.mxu0 0
    %133 = vmatpush1.bf16.msra.mxu0 %v115
    %134 = vmatprep.subr.bf16.mxu0 0
    %135 = vmatpush1.bf16.msra.mxu0 %v116
    %136 = vmatprep.subr.bf16.mxu0 0
    %137 = vmatpush1.bf16.msra.mxu0 %v117
    %138 = vmatprep.subr.bf16.mxu0 0
    %139 = vmatpush1.bf16.msra.mxu0 %v118
    %140 = vmatprep.subr.bf16.mxu0 0
    %141 = vmatpush1.bf16.msra.mxu0 %v119
    %142 = vmatprep.subr.bf16.mxu0 0
    %143 = vmatpush1.bf16.msra.mxu0 %v120
    %144 = vmatprep.subr.bf16.mxu0 0
    %145 = vmatpush1.bf16.msra.mxu0 %v121
    %146 = vmatprep.subr.bf16.mxu0 0
    %147 = vmatpush1.bf16.msra.mxu0 0
    %148 = vmatprep.subr.bf16.mxu0 0
    %149 = vmatpush1.bf16.msra.mxu0 0
    %150 = vmatprep.subr.bf16.mxu0 0
    %151 = vmatpush1.bf16.msra.mxu0 0
    %152 = vmatprep.subr.bf16.mxu0 0
    %153 = vmatpush1.bf16.msra.mxu0 0
    %154 = vmatprep.subr.bf16.mxu0 0
    %155 = vmatpush1.bf16.msra.mxu0 0
    %156 = vmatprep.subr.bf16.mxu0 0
    %157 = vmatpush1.bf16.msra.mxu0 0
    %158 = vmatprep.subr.bf16.mxu0 0
    %159 = vmatpush1.bf16.msra.mxu0 0
    %160 = vmatprep.subr.bf16.mxu0 0
    %161 = vmatpush1.bf16.msra.mxu0 0
    %162 = vmatprep.mubr.bf16.mxu0 0
    %163 = vmatmul.mubr.bf16.gmra.mrb[0].mxu0 %v80
    %v164 = vpop.f32.mrb[0].mxu0
    %v165 = vadd.f32 %v74, %v164
    %v166 = vpop.f32.mrb[0].mxu0
    %v167 = vpop.f32.mrb[0].mxu0
    %v168 = vadd.f32 %v74, %v167
    %v169 = vpop.f32.mrb[0].mxu0
    %170 = vdwg.mxu0
    %v171 = vmax.f32 %v165, 0.0
    %v172 = vmax.f32 %v168, 0.0
    %v173 = vld [vmem:[#allocation2] sm:$0xff]
    %v174 = vld [vmem:[#allocation2 + $0x8] sm:$0xff]
    %v175 = vpack.c.bf16 %v172, %v171
    %v176 = vld [vmem:[#allocation5] sm:$0xf]
    %v177 = vld [vmem:[#allocation5 + $0x4] sm:$0xf]
    %v178 = vld [vmem:[#allocation5 + $0x8] sm:$0xf]
    %v179 = vld [vmem:[#allocation5 + $0xc] sm:$0xf]
    %v180 = vld [vmem:[#allocation5 + $0x10] sm:$0xf]
    %v181 = vld [vmem:[#allocation5 + $0x14] sm:$0xf]
    %v182 = vld [vmem:[#allocation5 + $0x18] sm:$0xf]
    %v183 = vld [vmem:[#allocation5 + $0x1c] sm:$0xf]
    %v184 = vld [vmem:[#allocation5 + $0x20] sm:$0xf]
    %v185 = vld [vmem:[#allocation5 + $0x24] sm:$0xf]
    %v186 = vld [vmem:[#allocation5 + $0x28] sm:$0xf]
    %v187 = vld [vmem:[#allocation5 + $0x2c] sm:$0xf]
    %v188 = vld [vmem:[#allocation5 + $0x30] sm:$0xf]
    %v189 = vld [vmem:[#allocation5 + $0x34] sm:$0xf]
    %v190 = vld [vmem:[#allocation5 + $0x38] sm:$0xf]
    %v191 = vld [vmem:[#allocation5 + $0x3c] sm:$0xf]
    %v208 = vunpack.c.l.b16 %v176
    %v209 = vunpack.c.l.b16 %v177
    %v210 = vunpack.c.l.b16 %v178
    %v211 = vunpack.c.l.b16 %v179
    %v212 = vunpack.c.l.b16 %v180
    %v213 = vunpack.c.l.b16 %v181
    %v214 = vunpack.c.l.b16 %v182
    %v215 = vunpack.c.l.b16 %v183
    %v216 = vunpack.c.l.b16 %v184
    %v217 = vunpack.c.l.b16 %v185
    %v218 = vunpack.c.l.b16 %v186
    %v219 = vunpack.c.l.b16 %v187
    %v220 = vunpack.c.l.b16 %v188
    %v221 = vunpack.c.l.b16 %v189
    %v222 = vunpack.c.l.b16 %v190
    %v223 = vunpack.c.l.b16 %v191
    %v224 = vpack.c.b16 %v209, %v208
    %v225 = vpack.c.b16 %v211, %v210
    %v226 = vpack.c.b16 %v213, %v212
    %v227 = vpack.c.b16 %v215, %v214
    %v228 = vpack.c.b16 %v217, %v216
    %v229 = vpack.c.b16 %v219, %v218
    %v230 = vpack.c.b16 %v221, %v220
    %v231 = vpack.c.b16 %v223, %v222
    %240 = vmatprep.subr.bf16.mxu0 0
    %241 = vmatpush1.bf16.msra.mxu0 %v224
    %242 = vmatprep.subr.bf16.mxu0 0
    %243 = vmatpush1.bf16.msra.mxu0 %v225
    %244 = vmatprep.subr.bf16.mxu0 0
    %245 = vmatpush1.bf16.msra.mxu0 %v226
    %246 = vmatprep.subr.bf16.mxu0 0
    %247 = vmatpush1.bf16.msra.mxu0 %v227
    %248 = vmatprep.subr.bf16.mxu0 0
    %249 = vmatpush1.bf16.msra.mxu0 %v228
    %250 = vmatprep.subr.bf16.mxu0 0
    %251 = vmatpush1.bf16.msra.mxu0 %v229
    %252 = vmatprep.subr.bf16.mxu0 0
    %253 = vmatpush1.bf16.msra.mxu0 %v230
    %254 = vmatprep.subr.bf16.mxu0 0
    %255 = vmatpush1.bf16.msra.mxu0 %v231
    %256 = vmatprep.subr.bf16.mxu0 0
    %257 = vmatpush1.bf16.msra.mxu0 0
    %258 = vmatprep.subr.bf16.mxu0 0
    %259 = vmatpush1.bf16.msra.mxu0 0
    %260 = vmatprep.subr.bf16.mxu0 0
    %261 = vmatpush1.bf16.msra.mxu0 0
    %262 = vmatprep.subr.bf16.mxu0 0
    %263 = vmatpush1.bf16.msra.mxu0 0
    %264 = vmatprep.subr.bf16.mxu0 0
    %265 = vmatpush1.bf16.msra.mxu0 0
    %266 = vmatprep.subr.bf16.mxu0 0
    %267 = vmatpush1.bf16.msra.mxu0 0
    %268 = vmatprep.subr.bf16.mxu0 0
    %269 = vmatpush1.bf16.msra.mxu0 0
    %270 = vmatprep.subr.bf16.mxu0 0
    %271 = vmatpush1.bf16.msra.mxu0 0
    %272 = vmatprep.mubr.bf16.mxu0 0
    %273 = vmatmul.mubr.bf16.gmra.mrb[0].mxu0 %v175
    %v274 = vpop.f32.mrb[0].mxu0
    %v275 = vadd.f32 0.0, %v274
    %v276 = vpop.f32.mrb[0].mxu0
    %v277 = vpop.f32.mrb[0].mxu0
    %v278 = vadd.f32 0.0, %v277
    %v279 = vpop.f32.mrb[0].mxu0
    %280 = vdwg.mxu0
    %v281 = vadd.f32 %v173, %v275
    %v282 = vadd.f32 %v174, %v278
    %283 = vst [vmem:[#allocation2] sm:$0xff] %v281
    %284 = vst [vmem:[#allocation2 + $0x8] sm:$0xff] %v282
    %v285 = vld [vmem:[#allocation2] sm:$0xff]
    %v286 = vld [vmem:[#allocation2 + $0x8] sm:$0xff]
    %v287 = vld [vmem:[%s4] sm:$0x1]
    %v289 = vlaneseq
    %v290 = vshrl.u32 %v289, 7
    %v291 = vsub.s32 0, %v290
    %v292 = vrot.slane %v287, %v291
    %v294 = vadd.f32 %v285, %v292
    %v295 = vadd.f32 %v286, %v292
    %296 = vst [vmem:[%s5] sm:$0xff] %v294
    %297 = vst [vmem:[%s5 + $0x8] sm:$0xff] %v295
    // Predicated region
    $region30: #{two_layer_net.1} parent=1 // pred_check
      _
    $region31: #{two_layer_net.1} parent=1 // pred_check_branch
      %299 = sbr.rel (0) target = $region33
    $region32: #{two_layer_net.1} parent=1 // pred_region
      _
    $region33: #{two_layer_net.1} parent=1 // pred_fallthru
      _
    // Predicated region
    $region34: #{two_layer_net.1} parent=1 // pred_check
      _
    $region35: #{two_layer_net.1} parent=1 // pred_check_branch
      %301 = sbr.rel (0) target = $region37
    $region36: #{two_layer_net.1} parent=1 // pred_region
      _
    $region37: #{two_layer_net.1} parent=1 // pred_fallthru
      _
    %302 = vsyncpa [#allocation4], 1
    %303 = vsyncpa [#allocation6], 1

// kernel: two_layer_net.1
$region0: #{two_layer_net.1}
  #allocation0 [shape = 'u32[]', space=smem, size = 0x4, offset = 0x4, fixed_abs, tag = 'smem constant byte address 0x4 - core index']
  #allocation1 [shape = 'u32[144,128]{1,0:T(1,128)}', space=vmem, size = 0x12000, scoped, tag = 'internal scratch']
  #allocation2 [shape = 'f32[16,128]{1,0:T(8,128)}', space=vmem, size = 0x2000, scoped, tag = 'scratch operand']
  %s0 = inlined_call_operand.vmem [shape: bf16[16,128], index: 0, kind: input, shape index: {}]
  %s1 = inlined_call_operand.hbm [shape: bf16[128,128], index: 1, kind: input, shape index: {}]
  %s2 = inlined_call_operand.vmem [shape: f32[1,128], index: 2, kind: input, shape index: {}]
  %s3 = inlined_call_operand.hbm [shape: bf16[128,128], index: 3, kind: input, shape index: {}]
  %s4 = inlined_call_operand.vmem [shape: f32[1,128], index: 4, kind: input, shape index: {}]
  %s5 = inlined_call_operand.vmem [shape: f32[16,128], index: 5, kind: output, shape index: {}]
  %s6 = sld [smem:[#allocation0]]
  $region38: #{two_layer_net.1} parent=0
    _
  %s8 = ssub.s32 1, %s6
  %s9 = scalar_select 0, %s8, %s6
  $region1: #{two_layer_net.1} parent=0
    #allocation3 [shape = 'u8[32768]{0}', space=vmem, size = 0x8000, scoped, tag = 'input window, operand 1, single buffered']
    #allocation4 [shape = 's32[1]{0}', space=sflag, size = 0x4, scoped, tag = 'scoped memory for two_layer_net.1']
    #allocation5 [shape = 'u8[32768]{0}', space=vmem, size = 0x8000, scoped, tag = 'input window, operand 3, single buffered']
    #allocation6 [shape = 's32[1]{0}', space=sflag, size = 0x4, scoped, tag = 'scoped memory for two_layer_net.1']
    %10 = vsyncpa [#allocation4], 0
    %11 = vsyncpa [#allocation6], 0
    // Predicated region
    $region2: #{two_layer_net.1} parent=1 // pred_check
      _
    $region3: #{two_layer_net.1} parent=1 // pred_check_branch
      %13 = sbr.rel (0) target = $region5
    $region4: #{two_layer_net.1} parent=1 // pred_region
      _
    $region5: #{two_layer_net.1} parent=1 // pred_fallthru
      _
    // Predicated region
    $region6: #{two_layer_net.1} parent=1 // pred_check
      _
    $region7: #{two_layer_net.1} parent=1 // pred_check_branch
      %15 = sbr.rel (0) target = $region9
    $region8: #{two_layer_net.1} parent=1 // pred_region
      %s17 = ssub.s32 1024, 1024
      %18 = vsyncadd [#allocation4], %s17
      %s19 = sshll.u32 [#allocation3], 4
      %s20 = int_to_ptr.vmem [resolvable:$true] %s19
      %25 = dma.hbm_to_vmem [thread:$0]  %s1, 1024, %s20, [#allocation4], 64, 64, 4
    $region9: #{two_layer_net.1} parent=1 // pred_fallthru
      _
    // Predicated region
    $region10: #{two_layer_net.1} parent=1 // pred_check
      _
    $region11: #{two_layer_net.1} parent=1 // pred_check_branch
      %27 = sbr.rel (0) target = $region13
    $region12: #{two_layer_net.1} parent=1 // pred_region
      _
    $region13: #{two_layer_net.1} parent=1 // pred_fallthru
      _
    // Predicated region
    $region14: #{two_layer_net.1} parent=1 // pred_check
      _
    $region15: #{two_layer_net.1} parent=1 // pred_check_branch
      %29 = sbr.rel (0) target = $region17
    $region16: #{two_layer_net.1} parent=1 // pred_region
      %s31 = ssub.s32 1024, 1024
      %32 = vsyncadd [#allocation6], %s31
      %s33 = sshll.u32 [#allocation5], 4
      %s34 = int_to_ptr.vmem [resolvable:$true] %s33
      %39 = dma.hbm_to_vmem [thread:$0]  %s3, 1024, %s34, [#allocation6], 64, 64, 4
    $region17: #{two_layer_net.1} parent=1 // pred_fallthru
      _
    // Predicated region
    $region18: #{two_layer_net.1} parent=1 // pred_check
      _
    $region19: #{two_layer_net.1} parent=1 // pred_check_branch
      %41 = sbr.rel (0) target = $region21
    $region20: #{two_layer_net.1} parent=1 // pred_region
      _
    $region21: #{two_layer_net.1} parent=1 // pred_fallthru
      _
    // Predicated region
    $region22: #{two_layer_net.1} parent=1 // pred_check
      _
    $region23: #{two_layer_net.1} parent=1 // pred_check_branch
      %43 = sbr.rel (0) target = $region25
    $region24: #{two_layer_net.1} parent=1 // pred_region
      %44 = dma.done [#allocation4], 1024
    $region25: #{two_layer_net.1} parent=1 // pred_fallthru
      _
    // Predicated region
    $region26: #{two_layer_net.1} parent=1 // pred_check
      _
    $region27: #{two_layer_net.1} parent=1 // pred_check_branch
      %46 = sbr.rel (0) target = $region29
    $region28: #{two_layer_net.1} parent=1 // pred_region
      %47 = dma.done [#allocation6], 1024
    $region29: #{two_layer_net.1} parent=1 // pred_fallthru
      _
    %v49 = vld [vmem:[%s0] sm:$0xf]
    %v50 = vld [vmem:[%s0 + $0x4] sm:$0xf]
    %51 = vst [vmem:[#allocation2] sm:$0xff] 0.0
    %52 = vst [vmem:[#allocation2 + $0x8] sm:$0xff] 0.0
    %v53 = vld [vmem:[#allocation3] sm:$0xf]
    %v54 = vld [vmem:[#allocation3 + $0x4] sm:$0xf]
    %v55 = vld [vmem:[#allocation3 + $0x8] sm:$0xf]
    %v56 = vld [vmem:[#allocation3 + $0xc] sm:$0xf]
    %v57 = vld [vmem:[#allocation3 + $0x10] sm:$0xf]
    %v58 = vld [vmem:[#allocation3 + $0x14] sm:$0xf]
    %v59 = vld [vmem:[#allocation3 + $0x18] sm:$0xf]
    %v60 = vld [vmem:[#allocation3 + $0x1c] sm:$0xf]
    %v61 = vld [vmem:[#allocation3 + $0x20] sm:$0xf]
    %v62 = vld [vmem:[#allocation3 + $0x24] sm:$0xf]
    %v63 = vld [vmem:[#allocation3 + $0x28] sm:$0xf]
    %v64 = vld [vmem:[#allocation3 + $0x2c] sm:$0xf]
    %v65 = vld [vmem:[#allocation3 + $0x30] sm:$0xf]
    %v66 = vld [vmem:[#allocation3 + $0x34] sm:$0xf]
    %v67 = vld [vmem:[#allocation3 + $0x38] sm:$0xf]
    %v68 = vld [vmem:[#allocation3 + $0x3c] sm:$0xf]
    %v69 = vld [vmem:[%s2] sm:$0x1]
    %v71 = vlaneseq
    %v72 = vshrl.u32 %v71, 7
    %v73 = vsub.s32 0, %v72
    %v74 = vrot.slane %v69, %v73
    %v78 = vunpack.c.l.b16 %v49
    %v79 = vunpack.c.l.b16 %v50
    %v80 = vpack.c.b16 %v79, %v78
    %v98 = vunpack.c.l.b16 %v53
    %v99 = vunpack.c.l.b16 %v54
    %v100 = vunpack.c.l.b16 %v55
    %v101 = vunpack.c.l.b16 %v56
    %v102 = vunpack.c.l.b16 %v57
    %v103 = vunpack.c.l.b16 %v58
    %v104 = vunpack.c.l.b16 %v59
    %v105 = vunpack.c.l.b16 %v60
    %v106 = vunpack.c.l.b16 %v61
    %v107 = vunpack.c.l.b16 %v62
    %v108 = vunpack.c.l.b16 %v63
    %v109 = vunpack.c.l.b16 %v64
    %v110 = vunpack.c.l.b16 %v65
    %v111 = vunpack.c.l.b16 %v66
    %v112 = vunpack.c.l.b16 %v67
    %v113 = vunpack.c.l.b16 %v68
    %v114 = vpack.c.b16 %v99, %v98
    %v115 = vpack.c.b16 %v101, %v100
    %v116 = vpack.c.b16 %v103, %v102
    %v117 = vpack.c.b16 %v105, %v104
    %v118 = vpack.c.b16 %v107, %v106
    %v119 = vpack.c.b16 %v109, %v108
    %v120 = vpack.c.b16 %v111, %v110
    %v121 = vpack.c.b16 %v113, %v112
    %130 = vmatprep.subr.bf16.mxu0 0
    %131 = vmatpush1.bf16.msra.mxu0 %v114
    %132 = vmatprep.subr.bf16.mxu0 0
    %133 = vmatpush1.bf16.msra.mxu0 %v115
    %134 = vmatprep.subr.bf16.mxu0 0
    %135 = vmatpush1.bf16.msra.mxu0 %v116
    %136 = vmatprep.subr.bf16.mxu0 0
    %137 = vmatpush1.bf16.msra.mxu0 %v117
    %138 = vmatprep.subr.bf16.mxu0 0
    %139 = vmatpush1.bf16.msra.mxu0 %v118
    %140 = vmatprep.subr.bf16.mxu0 0
    %141 = vmatpush1.bf16.msra.mxu0 %v119
    %142 = vmatprep.subr.bf16.mxu0 0
    %143 = vmatpush1.bf16.msra.mxu0 %v120
    %144 = vmatprep.subr.bf16.mxu0 0
    %145 = vmatpush1.bf16.msra.mxu0 %v121
    %146 = vmatprep.subr.bf16.mxu0 0
    %147 = vmatpush1.bf16.msra.mxu0 0
    %148 = vmatprep.subr.bf16.mxu0 0
    %149 = vmatpush1.bf16.msra.mxu0 0
    %150 = vmatprep.subr.bf16.mxu0 0
    %151 = vmatpush1.bf16.msra.mxu0 0
    %152 = vmatprep.subr.bf16.mxu0 0
    %153 = vmatpush1.bf16.msra.mxu0 0
    %154 = vmatprep.subr.bf16.mxu0 0
    %155 = vmatpush1.bf16.msra.mxu0 0
    %156 = vmatprep.subr.bf16.mxu0 0
    %157 = vmatpush1.bf16.msra.mxu0 0
    %158 = vmatprep.subr.bf16.mxu0 0
    %159 = vmatpush1.bf16.msra.mxu0 0
    %160 = vmatprep.subr.bf16.mxu0 0
    %161 = vmatpush1.bf16.msra.mxu0 0
    %162 = vmatprep.mubr.bf16.mxu0 0
    %163 = vmatmul.mubr.bf16.gmra.mrb[0].mxu0 %v80
    %v164 = vpop.f32.mrb[0].mxu0
    %v165 = vadd.f32 %v74, %v164
    %v166 = vpop.f32.mrb[0].mxu0
    %v167 = vpop.f32.mrb[0].mxu0
    %v168 = vadd.f32 %v74, %v167
    %v169 = vpop.f32.mrb[0].mxu0
    %170 = vdwg.mxu0
    %v171 = vmax.f32 %v165, 0.0
    %v172 = vmax.f32 %v168, 0.0
    %v173 = vld [vmem:[#allocation2] sm:$0xff]
    %v174 = vld [vmem:[#allocation2 + $0x8] sm:$0xff]
    %v175 = vpack.c.bf16 %v172, %v171
    %v176 = vld [vmem:[#allocation5] sm:$0xf]
    %v177 = vld [vmem:[#allocation5 + $0x4] sm:$0xf]
    %v178 = vld [vmem:[#allocation5 + $0x8] sm:$0xf]
    %v179 = vld [vmem:[#allocation5 + $0xc] sm:$0xf]
    %v180 = vld [vmem:[#allocation5 + $0x10] sm:$0xf]
    %v181 = vld [vmem:[#allocation5 + $0x14] sm:$0xf]
    %v182 = vld [vmem:[#allocation5 + $0x18] sm:$0xf]
    %v183 = vld [vmem:[#allocation5 + $0x1c] sm:$0xf]
    %v184 = vld [vmem:[#allocation5 + $0x20] sm:$0xf]
    %v185 = vld [vmem:[#allocation5 + $0x24] sm:$0xf]
    %v186 = vld [vmem:[#allocation5 + $0x28] sm:$0xf]
    %v187 = vld [vmem:[#allocation5 + $0x2c] sm:$0xf]
    %v188 = vld [vmem:[#allocation5 + $0x30] sm:$0xf]
    %v189 = vld [vmem:[#allocation5 + $0x34] sm:$0xf]
    %v190 = vld [vmem:[#allocation5 + $0x38] sm:$0xf]
    %v191 = vld [vmem:[#allocation5 + $0x3c] sm:$0xf]
    %v208 = vunpack.c.l.b16 %v176
    %v209 = vunpack.c.l.b16 %v177
    %v210 = vunpack.c.l.b16 %v178
    %v211 = vunpack.c.l.b16 %v179
    %v212 = vunpack.c.l.b16 %v180
    %v213 = vunpack.c.l.b16 %v181
    %v214 = vunpack.c.l.b16 %v182
    %v215 = vunpack.c.l.b16 %v183
    %v216 = vunpack.c.l.b16 %v184
    %v217 = vunpack.c.l.b16 %v185
    %v218 = vunpack.c.l.b16 %v186
    %v219 = vunpack.c.l.b16 %v187
    %v220 = vunpack.c.l.b16 %v188
    %v221 = vunpack.c.l.b16 %v189
    %v222 = vunpack.c.l.b16 %v190
    %v223 = vunpack.c.l.b16 %v191
    %v224 = vpack.c.b16 %v209, %v208
    %v225 = vpack.c.b16 %v211, %v210
    %v226 = vpack.c.b16 %v213, %v212
    %v227 = vpack.c.b16 %v215, %v214
    %v228 = vpack.c.b16 %v217, %v216
    %v229 = vpack.c.b16 %v219, %v218
    %v230 = vpack.c.b16 %v221, %v220
    %v231 = vpack.c.b16 %v223, %v222
    %240 = vmatprep.subr.bf16.mxu0 0
    %241 = vmatpush1.bf16.msra.mxu0 %v224
    %242 = vmatprep.subr.bf16.mxu0 0
    %243 = vmatpush1.bf16.msra.mxu0 %v225
    %244 = vmatprep.subr.bf16.mxu0 0
    %245 = vmatpush1.bf16.msra.mxu0 %v226
    %246 = vmatprep.subr.bf16.mxu0 0
    %247 = vmatpush1.bf16.msra.mxu0 %v227
    %248 = vmatprep.subr.bf16.mxu0 0
    %249 = vmatpush1.bf16.msra.mxu0 %v228
    %250 = vmatprep.subr.bf16.mxu0 0
    %251 = vmatpush1.bf16.msra.mxu0 %v229
    %252 = vmatprep.subr.bf16.mxu0 0
    %253 = vmatpush1.bf16.msra.mxu0 %v230
    %254 = vmatprep.subr.bf16.mxu0 0
    %255 = vmatpush1.bf16.msra.mxu0 %v231
    %256 = vmatprep.subr.bf16.mxu0 0
    %257 = vmatpush1.bf16.msra.mxu0 0
    %258 = vmatprep.subr.bf16.mxu0 0
    %259 = vmatpush1.bf16.msra.mxu0 0
    %260 = vmatprep.subr.bf16.mxu0 0
    %261 = vmatpush1.bf16.msra.mxu0 0
    %262 = vmatprep.subr.bf16.mxu0 0
    %263 = vmatpush1.bf16.msra.mxu0 0
    %264 = vmatprep.subr.bf16.mxu0 0
    %265 = vmatpush1.bf16.msra.mxu0 0
    %266 = vmatprep.subr.bf16.mxu0 0
    %267 = vmatpush1.bf16.msra.mxu0 0
    %268 = vmatprep.subr.bf16.mxu0 0
    %269 = vmatpush1.bf16.msra.mxu0 0
    %270 = vmatprep.subr.bf16.mxu0 0
    %271 = vmatpush1.bf16.msra.mxu0 0
    %272 = vmatprep.mubr.bf16.mxu0 0
    %273 = vmatmul.mubr.bf16.gmra.mrb[0].mxu0 %v175
    %v274 = vpop.f32.mrb[0].mxu0
    %v275 = vadd.f32 0.0, %v274
    %v276 = vpop.f32.mrb[0].mxu0
    %v277 = vpop.f32.mrb[0].mxu0
    %v278 = vadd.f32 0.0, %v277
    %v279 = vpop.f32.mrb[0].mxu0
    %280 = vdwg.mxu0
    %v281 = vadd.f32 %v173, %v275
    %v282 = vadd.f32 %v174, %v278
    %283 = vst [vmem:[#allocation2] sm:$0xff] %v281
    %284 = vst [vmem:[#allocation2 + $0x8] sm:$0xff] %v282
    %v285 = vld [vmem:[#allocation2] sm:$0xff]
    %v286 = vld [vmem:[#allocation2 + $0x8] sm:$0xff]
    %v287 = vld [vmem:[%s4] sm:$0x1]
    %v289 = vlaneseq
    %v290 = vshrl.u32 %v289, 7
    %v291 = vsub.s32 0, %v290
    %v292 = vrot.slane %v287, %v291
    %v294 = vadd.f32 %v285, %v292
    %v295 = vadd.f32 %v286, %v292
    %296 = vst [vmem:[%s5] sm:$0xff] %v294
    %297 = vst [vmem:[%s5 + $0x8] sm:$0xff] %v295
    // Predicated region
    $region30: #{two_layer_net.1} parent=1 // pred_check
      _
    $region31: #{two_layer_net.1} parent=1 // pred_check_branch
      %299 = sbr.rel (0) target = $region33
    $region32: #{two_layer_net.1} parent=1 // pred_region
      _
    $region33: #{two_layer_net.1} parent=1 // pred_fallthru
      _
    // Predicated region
    $region34: #{two_layer_net.1} parent=1 // pred_check
      _
    $region35: #{two_layer_net.1} parent=1 // pred_check_branch
      %301 = sbr.rel (0) target = $region37
    $region36: #{two_layer_net.1} parent=1 // pred_region
      _
    $region37: #{two_layer_net.1} parent=1 // pred_fallthru
      _
    %302 = vsyncpa [#allocation4], 1
    %303 = vsyncpa [#allocation6], 1

</llo_original>
